<compile_context>
chip_gen: v5e
topology: v5e:2x2
jax: 0.10.0
libtpu: 0.0.40
codegen_flags: <defaults>
</compile_context>

<pallas_src>
import jax
import jax.numpy as jnp
from jax.experimental import pallas as pl
from jax.experimental.pallas import tpu as pltpu

HIDDEN_PAD = 128   # lane-dense hidden width (real hidden = 32, zero-padded)


def _round_up(x, m):
    return ((x + m - 1) // m) * m


def mlp_kernel(x_ref, w1_ref, b1_ref, w2_ref, b2_ref, o_ref):
    # In-kernel bf16 cast of the activation (VPU; free -- kernel is DMA-bound).
    x = x_ref[...].astype(jnp.bfloat16)
    # fc1: (TB, D_in)bf16 @ (D_in, 128)bf16 -> f32 accumulate on the MXU.
    h = jnp.dot(x, w1_ref[...], preferred_element_type=jnp.float32)
    # Bias + ReLU in f32 (VPU); zero-padded hidden columns stay exactly zero.
    h = jnp.maximum(h + b1_ref[...], 0.0)
    # dropout(0.1) in eval mode == identity.
    # fc2: cast activation to bf16 for the MXU, accumulate in f32, narrow N.
    out = jnp.dot(h.astype(jnp.bfloat16), w2_ref[...],
                  preferred_element_type=jnp.float32)
    o_ref[...] = (out + b2_ref[...]).astype(o_ref.dtype)


def prepare_params(w1, b1, w2, b2):
    """One-time parameter prep (hoisted out of the per-call forward).

    w1: (input_size, 32), b1: (1, 32) or (32,)
    w2: (32, output_size), b2: (1, output_size) or (output_size,)
    Returns lane-padded, bf16-cast weights ready for the kernel.
    """
    d_in, hidden = w1.shape
    out_size = w2.shape[1]
    w1p = jnp.zeros((d_in, HIDDEN_PAD), jnp.float32).at[:, :hidden].set(w1)
    b1p = jnp.zeros((1, HIDDEN_PAD), jnp.float32).at[:, :hidden].set(
        jnp.reshape(b1, (1, hidden)))
    w2p = jnp.zeros((HIDDEN_PAD, out_size), jnp.float32).at[:hidden, :].set(w2)
    b2p = jnp.reshape(b2, (1, out_size)).astype(jnp.float32)
    return (w1p.astype(jnp.bfloat16), b1p, w2p.astype(jnp.bfloat16), b2p)


def simple_test_model_forward(x, params, *, block_b=4096):
    """Fused forward pass for SimpleTestModel.

    x:      (B, input_size) float32
    params: output of prepare_params()
    returns (B, output_size) float32
    """
    w1b, b1p, w2b, b2p = params
    B, d_in = x.shape
    out_size = w2b.shape[1]

    # Batch tile: multiple of 8 (f32 sublanes); large to amortize per-step overhead.
    tb = min(block_b, _round_up(B, 8))
    if B >= 16:
        # Guarantee >=2 grid steps so "parallel" can use both TensorCores on v7x.
        tb = min(tb, _round_up(pl.cdiv(B, 2), 8))
    grid = (pl.cdiv(B, tb),)

    out = pl.pallas_call(
        mlp_kernel,
        out_shape=jax.ShapeDtypeStruct((B, out_size), jnp.float32),
        grid=grid,
        in_specs=[
            pl.BlockSpec((tb, d_in), lambda i: (i, 0)),               # x: streamed (f32)
            pl.BlockSpec((d_in, HIDDEN_PAD), lambda i: (0, 0)),       # w1: resident
            pl.BlockSpec((1, HIDDEN_PAD), lambda i: (0, 0)),          # b1: resident
            pl.BlockSpec((HIDDEN_PAD, out_size), lambda i: (0, 0)),   # w2: resident (narrow)
            pl.BlockSpec((1, out_size), lambda i: (0, 0)),            # b2: resident (narrow)
        ],
        out_specs=pl.BlockSpec((tb, out_size), lambda i: (i, 0)),     # narrow output
        compiler_params=pltpu.CompilerParams(
            dimension_semantics=("parallel",),   # batch axis shards across TCs on v7x
        ),
    )(x, w1b, b1p, w2b, b2p)
    return out


def init_params(key, input_size=64, hidden=32, output_size=4):
    """Deterministic parameter init (PyTorch-Linear-style uniform bounds)."""
    k1, k2, k3, k4 = jax.random.split(key, 4)
    bound1 = 1.0 / jnp.sqrt(input_size)
    bound2 = 1.0 / jnp.sqrt(hidden)
    w1 = jax.random.uniform(k1, (input_size, hidden), jnp.float32, -bound1, bound1)
    b1 = jax.random.uniform(k2, (1, hidden), jnp.float32, -bound1, bound1)
    w2 = jax.random.uniform(k3, (hidden, output_size), jnp.float32, -bound2, bound2)
    b2 = jax.random.uniform(k4, (1, output_size), jnp.float32, -bound2, bound2)
    return w1, b1, w2, b2


if __name__ == "__main__":
    key = jax.random.PRNGKey(0)
    kx, kp = jax.random.split(key)

    B, INPUT, HIDDEN, OUTPUT = 8, 64, 32, 4
    x = jax.random.normal(kx, (B, INPUT), dtype=jnp.float32)
    w1, b1, w2, b2 = init_params(kp, INPUT, HIDDEN, OUTPUT)

    # One-time parameter prep (hoisted; not part of the per-call forward).
    params = prepare_params(w1, b1, w2, b2)

    out = simple_test_model_forward(x, params)
    out = jax.block_until_ready(out)
    assert out.shape == (B, OUTPUT)

    # Reference that matches the kernel's bf16-operand / f32-accumulate path.
    xb = x.astype(jnp.bfloat16)
    h_ref = jnp.maximum(
        jnp.dot(xb, w1.astype(jnp.bfloat16), preferred_element_type=jnp.float32) + b1,
        0.0)
    ref_bf16 = jnp.dot(h_ref.astype(jnp.bfloat16), w2.astype(jnp.bfloat16),
                       preferred_element_type=jnp.float32) + b2
    assert jnp.allclose(out, ref_bf16, atol=1e-3, rtol=1e-3)

    # Loose check against the pure-f32 reference (bf16 quantization error only).
    ref_f32 = jnp.maximum(x @ w1 + b1, 0.0) @ w2 + b2
    assert jnp.allclose(out, ref_f32, atol=5e-2, rtol=5e-2)

    print("KERNEL_OK")
</pallas_src>

<mosaic_0001>
module attributes {stable_mosaic.version = 11 : i64} {
  func.func @mlp_kernel(%arg0: i32, %arg1: memref<8x64xf32, #tpu.memory_space<vmem>>, %arg2: memref<64x128xbf16, #tpu.memory_space<vmem>>, %arg3: memref<1x128xf32, #tpu.memory_space<vmem>>, %arg4: memref<128x4xbf16, #tpu.memory_space<vmem>>, %arg5: memref<1x4xf32, #tpu.memory_space<vmem>>, %arg6: memref<8x4xf32, #tpu.memory_space<vmem>>) attributes {dimension_semantics = [#tpu.dimension_semantics<parallel>], iteration_bounds = array<i64: 1>, scalar_prefetch = 0 : i64, scratch_operands = 0 : i64, tpu.core_type = #tpu.core_type<tc>, window_params = [{transform_indices = @transform_0, window_bounds = array<i64: 8, 64>}, {pipeline_mode = #tpu.pipeline_mode<synchronous>, transform_indices = @transform_1, window_bounds = array<i64: 64, 128>}, {pipeline_mode = #tpu.pipeline_mode<synchronous>, transform_indices = @transform_2, window_bounds = array<i64: 1, 128>}, {pipeline_mode = #tpu.pipeline_mode<synchronous>, transform_indices = @transform_3, window_bounds = array<i64: 128, 4>}, {pipeline_mode = #tpu.pipeline_mode<synchronous>, transform_indices = @transform_4, window_bounds = array<i64: 1, 4>}, {transform_indices = @transform_5, window_bounds = array<i64: 8, 4>}]} {
    %c0 = arith.constant 0 : index
    %c0_0 = arith.constant 0 : index
    %0 = vector.load %arg1[%c0, %c0_0] : memref<8x64xf32, #tpu.memory_space<vmem>>, vector<8x64xf32>
    %1 = arith.truncf %0 : vector<8x64xf32> to vector<8x64xbf16>
    %c0_1 = arith.constant 0 : index
    %c0_2 = arith.constant 0 : index
    %2 = vector.load %arg2[%c0_1, %c0_2] : memref<64x128xbf16, #tpu.memory_space<vmem>>, vector<64x128xbf16>
    %cst = arith.constant dense<0.000000e+00> : vector<8x128xf32>
    %3 = tpu.matmul %1, %2, %cst {dimension_numbers = #tpu.dot_dimension_numbers<[1], [0], [0], [1], [0, 0, 1, 1], [], []>} : vector<8x64xbf16>, vector<64x128xbf16>, vector<8x128xf32> -> vector<8x128xf32>
    %c0_3 = arith.constant 0 : index
    %c0_4 = arith.constant 0 : index
    %4 = vector.load %arg3[%c0_3, %c0_4] : memref<1x128xf32, #tpu.memory_space<vmem>>, vector<1x128xf32>
    %5 = vector.broadcast %4 : vector<1x128xf32> to vector<8x128xf32>
    %6 = arith.addf %3, %5 : vector<8x128xf32>
    %cst_5 = arith.constant 0.000000e+00 : f32
    %7 = vector.broadcast %cst_5 : f32 to vector<8x128xf32>
    %8 = arith.maximumf %6, %7 : vector<8x128xf32>
    %9 = arith.truncf %8 : vector<8x128xf32> to vector<8x128xbf16>
    %c0_6 = arith.constant 0 : index
    %c0_7 = arith.constant 0 : index
    %10 = vector.load %arg4[%c0_6, %c0_7] : memref<128x4xbf16, #tpu.memory_space<vmem>>, vector<128x4xbf16>
    %cst_8 = arith.constant dense<0.000000e+00> : vector<8x4xf32>
    %11 = tpu.matmul %9, %10, %cst_8 {dimension_numbers = #tpu.dot_dimension_numbers<[1], [0], [0], [1], [0, 0, 1, 1], [], []>} : vector<8x128xbf16>, vector<128x4xbf16>, vector<8x4xf32> -> vector<8x4xf32>
    %c0_9 = arith.constant 0 : index
    %c0_10 = arith.constant 0 : index
    %12 = vector.load %arg5[%c0_9, %c0_10] : memref<1x4xf32, #tpu.memory_space<vmem>>, vector<1x4xf32>
    %13 = vector.broadcast %12 : vector<1x4xf32> to vector<8x4xf32>
    %14 = arith.addf %11, %13 : vector<8x4xf32>
    %c0_11 = arith.constant 0 : index
    %c0_12 = arith.constant 0 : index
    %15 = vector.load %arg6[%c0_11, %c0_12] : memref<8x4xf32, #tpu.memory_space<vmem>>, vector<8x4xf32>
    tpu.vector_store %arg6[%c0_11, %c0_12], %14 {strides = array<i32>} : memref<8x4xf32, #tpu.memory_space<vmem>>, vector<8x4xf32>,
    return
  }
  func.func @transform_0(%arg0: i32) -> (i32, i32) {
    %c0_i32 = arith.constant 0 : i32
    %c0_i32_0 = arith.constant 0 : i32
    return %arg0, %c0_i32 : i32, i32
  }
  func.func @transform_1(%arg0: i32) -> (i32, i32) {
    %c0_i32 = arith.constant 0 : i32
    %c0_i32_0 = arith.constant 0 : i32
    %c0_i32_1 = arith.constant 0 : i32
    return %c0_i32, %c0_i32_0 : i32, i32
  }
  func.func @transform_2(%arg0: i32) -> (i32, i32) {
    %c0_i32 = arith.constant 0 : i32
    %c0_i32_0 = arith.constant 0 : i32
    %c0_i32_1 = arith.constant 0 : i32
    return %c0_i32, %c0_i32_0 : i32, i32
  }
  func.func @transform_3(%arg0: i32) -> (i32, i32) {
    %c0_i32 = arith.constant 0 : i32
    %c0_i32_0 = arith.constant 0 : i32
    %c0_i32_1 = arith.constant 0 : i32
    return %c0_i32, %c0_i32_0 : i32, i32
  }
  func.func @transform_4(%arg0: i32) -> (i32, i32) {
    %c0_i32 = arith.constant 0 : i32
    %c0_i32_0 = arith.constant 0 : i32
    %c0_i32_1 = arith.constant 0 : i32
    return %c0_i32, %c0_i32_0 : i32, i32
  }
  func.func @transform_5(%arg0: i32) -> (i32, i32) {
    %c0_i32 = arith.constant 0 : i32
    %c0_i32_0 = arith.constant 0 : i32
    return %arg0, %c0_i32 : i32, i32
  }
}

</mosaic_0001>

<llo_original>
// kernel: tpu_custom_call.1
$region0: #{tpu_custom_call.1}
  #allocation0 [shape = 'u32[]', space=smem, size = 0x4, offset = 0x4, fixed_abs, tag = 'smem constant byte address 0x4 - core index']
  #allocation1 [shape = 'u32[72,128]{1,0:T(1,128)}', space=vmem, size = 0x9000, scoped, tag = 'internal scratch']
  %s0 = inlined_call_operand.vmem [shape: f32[8,64], index: 0, kind: input, shape index: {}]
  %s1 = inlined_call_operand.vmem [shape: bf16[64,128], index: 1, kind: input, shape index: {}]
  %s2 = inlined_call_operand.vmem [shape: f32[1,128], index: 2, kind: input, shape index: {}]
  %s3 = inlined_call_operand.vmem [shape: bf16[128,4], index: 3, kind: input, shape index: {}]
  %s4 = inlined_call_operand.vmem [shape: f32[1,4], index: 4, kind: input, shape index: {}]
  %s5 = inlined_call_operand.vmem [shape: f32[8,4], index: 5, kind: output, shape index: {}]
  %s6 = sld [smem:[#allocation0]]
  $region30: #{tpu_custom_call.1} parent=0
    _
  %s8 = ssub.s32 1, %s6
  %s9 = scalar_select 0, %s8, %s6
  // Predicated region
  $region2: #{tpu_custom_call.1} parent=0 // pred_check
    _
  $region3: #{tpu_custom_call.1} parent=0 // pred_check_branch
    %11 = sbr.rel (0) target = $region5
  $region4: #{tpu_custom_call.1} parent=0 // pred_region
    _
  $region5: #{tpu_custom_call.1} parent=0 // pred_fallthru
    _
  // Predicated region
  $region6: #{tpu_custom_call.1} parent=0 // pred_check
    _
  $region7: #{tpu_custom_call.1} parent=0 // pred_check_branch
    %13 = sbr.rel (0) target = $region9
  $region8: #{tpu_custom_call.1} parent=0 // pred_region
    _
  $region9: #{tpu_custom_call.1} parent=0 // pred_fallthru
    _
  // Predicated region
  $region10: #{tpu_custom_call.1} parent=0 // pred_check
    _
  $region11: #{tpu_custom_call.1} parent=0 // pred_check_branch
    %15 = sbr.rel (0) target = $region13
  $region12: #{tpu_custom_call.1} parent=0 // pred_region
    _
  $region13: #{tpu_custom_call.1} parent=0 // pred_fallthru
    _
  // Predicated region
  $region14: #{tpu_custom_call.1} parent=0 // pred_check
    _
  $region15: #{tpu_custom_call.1} parent=0 // pred_check_branch
    %17 = sbr.rel (0) target = $region17
  $region16: #{tpu_custom_call.1} parent=0 // pred_region
    _
  $region17: #{tpu_custom_call.1} parent=0 // pred_fallthru
    _
  // Predicated region
  $region18: #{tpu_custom_call.1} parent=0 // pred_check
    _
  $region19: #{tpu_custom_call.1} parent=0 // pred_check_branch
    %19 = sbr.rel (0) target = $region21
  $region20: #{tpu_custom_call.1} parent=0 // pred_region
    _
  $region21: #{tpu_custom_call.1} parent=0 // pred_fallthru
    _
  %v21 = vld [vmem:[%s0] sm:$0xff]
  %v22 = vpack.c.bf16 %v21, %v21
  %v23 = vld [vmem:[%s1] sm:$0xf]
  %v24 = vld [vmem:[%s1 + $0x4] sm:$0xf]
  %v25 = vld [vmem:[%s1 + $0x8] sm:$0xf]
  %v26 = vld [vmem:[%s1 + $0xc] sm:$0xf]
  %v27 = vld [vmem:[%s1 + $0x10] sm:$0xf]
  %v28 = vld [vmem:[%s1 + $0x14] sm:$0xf]
  %v29 = vld [vmem:[%s1 + $0x18] sm:$0xf]
  %v30 = vld [vmem:[%s1 + $0x1c] sm:$0xf]
  %v31 = vld [vmem:[%s2] sm:$0x1]
  %v33 = vperm.slane %v31, 0
  %v43 = vunpack.c.l.b16 %v23
  %v44 = vunpack.c.l.b16 %v24
  %v45 = vunpack.c.l.b16 %v25
  %v46 = vunpack.c.l.b16 %v26
  %v47 = vunpack.c.l.b16 %v27
  %v48 = vunpack.c.l.b16 %v28
  %v49 = vunpack.c.l.b16 %v29
  %v50 = vunpack.c.l.b16 %v30
  %v51 = vpack.c.b16 %v44, %v43
  %v52 = vpack.c.b16 %v46, %v45
  %v53 = vpack.c.b16 %v48, %v47
  %v54 = vpack.c.b16 %v50, %v49
  %vm59 = vcmask 523264
  %v61 = vsel %vm59, %v22, 0
  %63 = vmatpush.bf16.msra.mxu0 0
  %64 = vmatpush.bf16.msra.mxu0 0
  %65 = vmatpush.bf16.msra.mxu0 0
  %66 = vmatpush.bf16.msra.mxu0 0
  %67 = vmatpush.bf16.msra.mxu0 %v54
  %68 = vmatpush.bf16.msra.mxu0 %v53
  %69 = vmatpush.bf16.msra.mxu0 %v52
  %70 = vmatpush.bf16.msra.mxu0 %v51
  %71 = vmatmul.bf16.gmra.mxu0 %v61
  %v72 = vpop.f32.mrf.mxu0
  %v73 = vadd.f32 %v33, %v72
  %v74 = vpop.f32.mrf.mxu0
  %75 = vdwg.mxu0
  %v76 = vmax.f32 %v73, 0.0
  %v77 = vpack.c.bf16 %v76, %v76
  %v78 = vld [vmem:[%s3] sm:$0xf]
  %v79 = vld [vmem:[%s3 + $0x4] sm:$0xf]
  %v80 = vld [vmem:[%s3 + $0x8] sm:$0xf]
  %v81 = vld [vmem:[%s3 + $0xc] sm:$0xf]
  %v82 = vld [vmem:[%s3 + $0x10] sm:$0xf]
  %v83 = vld [vmem:[%s3 + $0x14] sm:$0xf]
  %v84 = vld [vmem:[%s3 + $0x18] sm:$0xf]
  %v85 = vld [vmem:[%s3 + $0x1c] sm:$0xf]
  %v86 = vld [vmem:[%s3 + $0x20] sm:$0xf]
  %v87 = vld [vmem:[%s3 + $0x24] sm:$0xf]
  %v88 = vld [vmem:[%s3 + $0x28] sm:$0xf]
  %v89 = vld [vmem:[%s3 + $0x2c] sm:$0xf]
  %v90 = vld [vmem:[%s3 + $0x30] sm:$0xf]
  %v91 = vld [vmem:[%s3 + $0x34] sm:$0xf]
  %v92 = vld [vmem:[%s3 + $0x38] sm:$0xf]
  %v93 = vld [vmem:[%s3 + $0x3c] sm:$0xf]
  %v94 = vld [vmem:[%s4] sm:$0x1]
  %v96 = vperm.slane %v94, 0
  %v114 = vunpack.c.l.b16 %v78
  %v115 = vunpack.c.l.b16 %v79
  %v116 = vunpack.c.l.b16 %v80
  %v117 = vunpack.c.l.b16 %v81
  %v118 = vunpack.c.l.b16 %v82
  %v119 = vunpack.c.l.b16 %v83
  %v120 = vunpack.c.l.b16 %v84
  %v121 = vunpack.c.l.b16 %v85
  %v122 = vunpack.c.l.b16 %v86
  %v123 = vunpack.c.l.b16 %v87
  %v124 = vunpack.c.l.b16 %v88
  %v125 = vunpack.c.l.b16 %v89
  %v126 = vunpack.c.l.b16 %v90
  %v127 = vunpack.c.l.b16 %v91
  %v128 = vunpack.c.l.b16 %v92
  %v129 = vunpack.c.l.b16 %v93
  %v130 = vpack.c.b16 %v115, %v114
  %v131 = vpack.c.b16 %v117, %v116
  %v132 = vpack.c.b16 %v119, %v118
  %v133 = vpack.c.b16 %v121, %v120
  %v134 = vpack.c.b16 %v123, %v122
  %v135 = vpack.c.b16 %v125, %v124
  %v136 = vpack.c.b16 %v127, %v126
  %v137 = vpack.c.b16 %v129, %v128
  %146 = vmatpush.bf16.msra.mxu0 %v137
  %147 = vmatpush.bf16.msra.mxu0 %v136
  %148 = vmatpush.bf16.msra.mxu0 %v135
  %149 = vmatpush.bf16.msra.mxu0 %v134
  %150 = vmatpush.bf16.msra.mxu0 %v133
  %151 = vmatpush.bf16.msra.mxu0 %v132
  %152 = vmatpush.bf16.msra.mxu0 %v131
  %153 = vmatpush.bf16.msra.mxu0 %v130
  %154 = vmatmul.bf16.gmra.mxu0 %v77
  %v155 = vpop.f32.mrf.mxu0
  %v156 = vadd.f32 %v96, %v155
  %v157 = vpop.f32.mrf.mxu0
  %158 = vdwg.mxu0
  %vm159 = vcmask 31744
  %160 = vst.msk [vmem:[%s5] sm:$0xff] %vm159, %v156
  // Predicated region
  $region22: #{tpu_custom_call.1} parent=0 // pred_check
    _
  $region23: #{tpu_custom_call.1} parent=0 // pred_check_branch
    %162 = sbr.rel (0) target = $region25
  $region24: #{tpu_custom_call.1} parent=0 // pred_region
    _
  $region25: #{tpu_custom_call.1} parent=0 // pred_fallthru
    _
  // Predicated region
  $region26: #{tpu_custom_call.1} parent=0 // pred_check
    _
  $region27: #{tpu_custom_call.1} parent=0 // pred_check_branch
    %164 = sbr.rel (0) target = $region29
  $region28: #{tpu_custom_call.1} parent=0 // pred_region
    _
  $region29: #{tpu_custom_call.1} parent=0 // pred_fallthru
    _

</llo_original>
